<compile_context>
chip_gen: v5e
topology: v5e:2x2
jax: 0.10.0
libtpu: 0.0.40
codegen_flags: <defaults>
</compile_context>

<pallas_src>
import functools
import math

import jax
import jax.numpy as jnp
from jax import lax
from jax.experimental import pallas as pl
from jax.experimental.pallas import tpu as pltpu


def _cdiv(a, b):
    return -(-a // b)


def _pack_factor(T, A):
    """Lane-packing factor k: (T, A) -> (T//k, k*A) with k*A a multiple of 128."""
    g = math.gcd(A, 128)
    k = 128 // g
    if k > 1 and T % k == 0:
        return k
    return 1


def _vmem_capacity_bytes():
    try:
        cap = getattr(pltpu.get_tpu_info(), "vmem_capacity_bytes", None)
        if cap:
            return int(cap)
    except Exception:
        pass
    return 64 * 1024 * 1024  # assume v7x (most restrictive) if the query fails


def _plan_blocks(rows, lane_width, in_itemsize, budget_bytes, pack):
    """Choose rows-per-block and #blocks against a padded-lane VMEM budget."""
    lanes = _cdiv(lane_width, 128) * 128              # (8,128) tiling pads lanes
    per_row = (4 * lanes * in_itemsize                # 2 inputs x 2 pipeline bufs
               + 3 * lanes * 4                        # f32 upcasts + product temp
               + (pack + 1) * 128 * 4)                # per-timestep return temps
    if rows * per_row <= budget_bytes:
        return rows, 1                                # single resident block
    sub = {4: 8, 2: 16, 1: 32}.get(in_itemsize, 8)    # dense sublanes per dtype
    cap = max(sub, (budget_bytes // per_row) // sub * sub)
    if cap >= rows:
        return rows, 1
    # Prefer a block size that divides `rows` exactly (no masking) if one
    # exists within 2x of the cap; otherwise take the cap and mask the tail.
    tile = cap
    t = cap
    while t >= max(sub, cap // 2):
        if rows % t == 0:
            tile = t
            break
        t -= sub
    return tile, _cdiv(rows, tile)


def _neg_sharpe_partials_kernel(yp_ref, yt_ref, sum_ref, m2_ref, *,
                                num_assets, pack, tile_rows, tiles_per_core,
                                rows_total, masked):
    c = pl.program_id(0)            # core slice ("parallel" axis)
    i = pl.program_id(1)            # block within this core's slice
    g = c * tiles_per_core + i      # global block slot

    yp = yp_ref[...].astype(jnp.float32)
    yt = yt_ref[...].astype(jnp.float32)
    prod = yp * yt                  # (tile_rows, pack * num_assets)

    if masked:
        row_ids = g * tile_rows + lax.broadcasted_iota(
            jnp.int32, (prod.shape[0], 1), 0)
        valid = row_ids < rows_total                       # (tile_rows, 1)
        start = jnp.minimum(g * tile_rows, rows_total)
        end = jnp.minimum(start + tile_rows, rows_total)
        nb_f = ((end - start) * pack).astype(jnp.float32)  # samples this block
        na_f = ((start - c * tiles_per_core * tile_rows)
                * pack).astype(jnp.float32)                # samples so far (core)
        inv_nb = 1.0 / jnp.maximum(nb_f, 1.0)
    else:
        valid = None
        nb_f = jnp.float32(tile_rows * pack)
        na_f = (i * (tile_rows * pack)).astype(jnp.float32)
        inv_nb = jnp.float32(1.0 / (tile_rows * pack))     # compile-time const

    # Per-timestep portfolio returns: `pack` lane-groups of `num_assets` lanes.
    r_slots = []
    for s in range(pack):
        r_s = jnp.sum(prod[:, s * num_assets:(s + 1) * num_assets],
                      axis=1, keepdims=True)               # (tile_rows, 1)
        if masked:
            r_s = jnp.where(valid, r_s, 0.0)
        r_slots.append(r_s)

    row_sum = r_slots[0]
    for s in range(1, pack):
        row_sum = row_sum + r_slots[s]
    sb = jnp.sum(row_sum, keepdims=True)                   # (1, 1) block sum
    mb = sb * inv_nb                                        # (1, 1) block mean

    m2b = jnp.zeros_like(sb)
    for s in range(pack):
        dev = r_slots[s] - mb
        if masked:
            dev = jnp.where(valid, dev, 0.0)
        m2b = m2b + jnp.sum(dev * dev, keepdims=True)       # (1, 1) block M2

    @pl.when(i == 0)
    def _():
        sum_ref[0] = sb
        m2_ref[0] = m2b

    @pl.when(i > 0)
    def _():
        # Chan parallel combination into the resident per-core output block.
        sa = sum_ref[0]
        m2a = m2_ref[0]
        n_f = na_f + nb_f
        delta = mb - sa * (1.0 / na_f)     # na_f >= 1 whenever i > 0
        sum_ref[0] = sa + sb
        m2_ref[0] = m2a + m2b + delta * delta * (na_f * nb_f / n_f)


def negative_sharpe_loss(y_pred, y_true, *, max_block_bytes=None):
    """Pallas TPU implementation of NegativeSharpeLoss.forward."""
    assert y_pred.ndim == 2 and y_pred.shape == y_true.shape
    T, A = y_pred.shape

    # Torch parity: downcast y_pred to y_true.dtype if the dtypes differ.
    if y_pred.dtype != y_true.dtype:
        y_pred = y_pred.astype(y_true.dtype)
    in_itemsize = jnp.dtype(y_true.dtype).itemsize

    # Lane-dense packing (free, row-major contiguous reshape).
    pack = _pack_factor(T, A)
    rows, lane_width = T // pack, pack * A
    yp = y_pred.reshape(rows, lane_width)
    yt = y_true.reshape(rows, lane_width)

    # Generation-aware VMEM budgeting.
    vmem_cap = _vmem_capacity_bytes()
    vmem_limit = min(max(vmem_cap // 2, 16 * 1024 * 1024), 64 * 1024 * 1024)
    block_budget = (vmem_limit // 2) if max_block_bytes is None else max_block_bytes

    tile_rows, ntiles = _plan_blocks(rows, lane_width, in_itemsize,
                                     block_budget, pack)
    num_cores = 2 if ntiles >= 2 else 1           # use both TCs on v7x
    tiles_per_core = _cdiv(ntiles, num_cores)
    masked = (num_cores * tiles_per_core * tile_rows) != rows
    last_block = ntiles - 1

    kernel = functools.partial(
        _neg_sharpe_partials_kernel,
        num_assets=A, pack=pack, tile_rows=tile_rows,
        tiles_per_core=tiles_per_core, rows_total=rows, masked=masked)

    in_spec = pl.BlockSpec(
        (tile_rows, lane_width),
        lambda c, i: (jnp.minimum(c * tiles_per_core + i, last_block), 0))
    out_spec = pl.BlockSpec((1, 1, 1), lambda c, i: (c, 0, 0))

    cost = pl.CostEstimate(
        flops=2 * T * A + 8 * T,
        transcendentals=0,
        bytes_accessed=2 * T * A * in_itemsize + 8 * num_cores,
    )

    part_sum, part_m2 = pl.pallas_call(
        kernel,
        out_shape=(jax.ShapeDtypeStruct((num_cores, 1, 1), jnp.float32),
                   jax.ShapeDtypeStruct((num_cores, 1, 1), jnp.float32)),
        grid=(num_cores, tiles_per_core),
        in_specs=[in_spec, in_spec],
        out_specs=(out_spec, out_spec),
        compiler_params=pltpu.CompilerParams(
            dimension_semantics=("parallel", "arbitrary"),
            vmem_limit_bytes=vmem_limit),
        cost_estimate=cost,
    )(yp, yt)

    # Final Chan merge of the per-core partials + Sharpe in plain XLA
    # (a handful of scalar ops), as suggested by the perf review.
    s0 = part_sum[0, 0, 0]
    m20 = part_m2[0, 0, 0]
    if num_cores == 2:
        rows0 = min(tiles_per_core * tile_rows, rows)
        n0 = float(rows0 * pack)
        n1 = float((rows - rows0) * pack)
        s1 = part_sum[1, 0, 0]
        m21 = part_m2[1, 0, 0]
        delta = s1 / n1 - s0 / n0
        total_sum = s0 + s1
        total_m2 = m20 + m21 + delta * delta * (n0 * n1 / (n0 + n1))
    else:
        total_sum = s0
        total_m2 = m20

    mean = total_sum / T
    var = total_m2 / (T - 1)          # unbiased (ddof=1), like torch.std
    loss = -(mean / jnp.sqrt(var))    # T==1 or zero variance -> nan/inf (torch parity)
    return loss.astype(y_true.dtype)


if __name__ == "__main__":
    key = jax.random.PRNGKey(0)
    k1, k2, k3, k4, k5, k6 = jax.random.split(key, 6)

    def ref_loss(yp, yt):
        r = jnp.sum(yp * yt, axis=1)
        return -(jnp.mean(r) / jnp.std(r, ddof=1))

    # 1) Small case: 8 time steps x 32 assets (packed k=4, single block).
    T, A = 8, 32
    y_pred = jax.random.normal(k1, (T, A), dtype=jnp.float32)
    y_true = jax.random.normal(k2, (T, A), dtype=jnp.float32) * 0.01
    loss = negative_sharpe_loss(y_pred, y_true)
    jax.block_until_ready(loss)
    assert jnp.allclose(loss, ref_loss(y_pred, y_true), rtol=1e-5, atol=1e-6), \
        (loss, ref_loss(y_pred, y_true))

    # 2) Larger case: single-block fast path (1000 x 32 packs to 250 x 128).
    T2, A2 = 1000, 32
    y_pred2 = jax.random.normal(k3, (T2, A2), dtype=jnp.float32)
    y_true2 = jax.random.normal(k4, (T2, A2), dtype=jnp.float32) * 0.01
    loss2 = negative_sharpe_loss(y_pred2, y_true2)
    jax.block_until_ready(loss2)
    ref2 = ref_loss(y_pred2, y_true2)
    assert jnp.allclose(loss2, ref2, rtol=1e-4, atol=1e-6), (loss2, ref2)

    # 3) Same data, tiny forced block budget: exercises the multi-block,
    #    two-core-partial, masked-tail Chan-combine path.
    loss3 = negative_sharpe_loss(y_pred2, y_true2, max_block_bytes=64 * 1024)
    jax.block_until_ready(loss3)
    assert jnp.allclose(loss3, ref2, rtol=2e-4, atol=2e-6), (loss3, ref2)

    # 4) Non-packable lane width (A=100, T=97): unpacked single-block path.
    T4, A4 = 97, 100
    y_pred4 = jax.random.normal(k5, (T4, A4), dtype=jnp.float32)
    y_true4 = jax.random.normal(k6, (T4, A4), dtype=jnp.float32) * 0.01
    loss4 = negative_sharpe_loss(y_pred4, y_true4)
    jax.block_until_ready(loss4)
    ref4 = ref_loss(y_pred4, y_true4)
    assert jnp.allclose(loss4, ref4, rtol=2e-4, atol=5e-6), (loss4, ref4)

    print("KERNEL_OK")
</pallas_src>

<mosaic_0001>
module attributes {stable_mosaic.version = 11 : i64} {
  func.func @_neg_sharpe_partials_kernel(%arg0: i32, %arg1: i32, %arg2: memref<2x128xf32, #tpu.memory_space<vmem>>, %arg3: memref<2x128xf32, #tpu.memory_space<vmem>>, %arg4: memref<1x1x1xf32, #tpu.memory_space<vmem>>, %arg5: memref<1x1x1xf32, #tpu.memory_space<vmem>>) attributes {dimension_semantics = [#tpu.dimension_semantics<parallel>, #tpu.dimension_semantics<arbitrary>], iteration_bounds = array<i64: 1, 1>, scalar_prefetch = 0 : i64, scratch_operands = 0 : i64, tpu.core_type = #tpu.core_type<tc>, window_params = [{transform_indices = @transform_0, window_bounds = array<i64: 2, 128>}, {transform_indices = @transform_1, window_bounds = array<i64: 2, 128>}, {transform_indices = @transform_2, window_bounds = array<i64: 1, 1, 1>}, {transform_indices = @transform_3, window_bounds = array<i64: 1, 1, 1>}]} {
    %c0 = arith.constant 0 : index
    %c0_0 = arith.constant 0 : index
    %0 = vector.load %arg2[%c0, %c0_0] : memref<2x128xf32, #tpu.memory_space<vmem>>, vector<2x128xf32>
    %c0_1 = arith.constant 0 : index
    %c0_2 = arith.constant 0 : index
    %1 = vector.load %arg3[%c0_1, %c0_2] : memref<2x128xf32, #tpu.memory_space<vmem>>, vector<2x128xf32>
    %2 = arith.mulf %0, %1 : vector<2x128xf32>
    %c8_i32 = arith.constant 8 : i32
    %3 = arith.muli %arg1, %c8_i32 : i32
    %4 = arith.sitofp %3 : i32 to f32
    %5 = vector.extract_strided_slice %2 {offsets = [0, 0], sizes = [2, 32], strides = [1, 1]} : vector<2x128xf32> to vector<2x32xf32>
    %cst = arith.constant dense<0.000000e+00> : vector<2xf32>
    %6 = vector.multi_reduction <add>, %5, %cst [1] : vector<2x32xf32> to vector<2xf32>
    %7 = vector.shape_cast %6 : vector<2xf32> to vector<2x1xf32>
    %8 = vector.extract_strided_slice %2 {offsets = [0, 32], sizes = [2, 32], strides = [1, 1]} : vector<2x128xf32> to vector<2x32xf32>
    %cst_3 = arith.constant dense<0.000000e+00> : vector<2xf32>
    %9 = vector.multi_reduction <add>, %8, %cst_3 [1] : vector<2x32xf32> to vector<2xf32>
    %10 = vector.shape_cast %9 : vector<2xf32> to vector<2x1xf32>
    %11 = vector.extract_strided_slice %2 {offsets = [0, 64], sizes = [2, 32], strides = [1, 1]} : vector<2x128xf32> to vector<2x32xf32>
    %cst_4 = arith.constant dense<0.000000e+00> : vector<2xf32>
    %12 = vector.multi_reduction <add>, %11, %cst_4 [1] : vector<2x32xf32> to vector<2xf32>
    %13 = vector.shape_cast %12 : vector<2xf32> to vector<2x1xf32>
    %14 = vector.extract_strided_slice %2 {offsets = [0, 96], sizes = [2, 32], strides = [1, 1]} : vector<2x128xf32> to vector<2x32xf32>
    %cst_5 = arith.constant dense<0.000000e+00> : vector<2xf32>
    %15 = vector.multi_reduction <add>, %14, %cst_5 [1] : vector<2x32xf32> to vector<2xf32>
    %16 = vector.shape_cast %15 : vector<2xf32> to vector<2x1xf32>
    %17 = arith.addf %7, %10 : vector<2x1xf32>
    %18 = arith.addf %17, %13 : vector<2x1xf32>
    %19 = arith.addf %18, %16 : vector<2x1xf32>
    %20 = vector.shape_cast %19 : vector<2x1xf32> to vector<1x2x1xf32>
    %cst_6 = arith.constant dense<0.000000e+00> : vector<1xf32>
    %21 = vector.multi_reduction <add>, %20, %cst_6 [1, 2] : vector<1x2x1xf32> to vector<1xf32>
    %22 = vector.shape_cast %21 : vector<1xf32> to vector<1x1x1xf32>
    %23 = vector.extract %22[0, 0, 0] : f32 from vector<1x1x1xf32>
    %24 = vector.broadcast %23 : f32 to vector<1x1xf32>
    %cst_7 = arith.constant 1.250000e-01 : f32
    %25 = vector.broadcast %cst_7 : f32 to vector<1x1xf32>
    %26 = arith.mulf %24, %25 : vector<1x1xf32>
    %cst_8 = arith.constant 0.000000e+00 : f32
    %27 = vector.broadcast %cst_8 : f32 to vector<1x1xf32>
    %28 = vector.broadcast %26 : vector<1x1xf32> to vector<2x1xf32>
    %29 = arith.subf %7, %28 : vector<2x1xf32>
    %30 = arith.mulf %29, %29 : vector<2x1xf32>
    %31 = vector.shape_cast %30 : vector<2x1xf32> to vector<1x2x1xf32>
    %cst_9 = arith.constant dense<0.000000e+00> : vector<1xf32>
    %32 = vector.multi_reduction <add>, %31, %cst_9 [1, 2] : vector<1x2x1xf32> to vector<1xf32>
    %33 = vector.shape_cast %32 : vector<1xf32> to vector<1x1x1xf32>
    %34 = vector.extract %33[0, 0, 0] : f32 from vector<1x1x1xf32>
    %35 = vector.broadcast %34 : f32 to vector<1x1xf32>
    %36 = arith.addf %27, %35 : vector<1x1xf32>
    %37 = vector.broadcast %26 : vector<1x1xf32> to vector<2x1xf32>
    %38 = arith.subf %10, %37 : vector<2x1xf32>
    %39 = arith.mulf %38, %38 : vector<2x1xf32>
    %40 = vector.shape_cast %39 : vector<2x1xf32> to vector<1x2x1xf32>
    %cst_10 = arith.constant dense<0.000000e+00> : vector<1xf32>
    %41 = vector.multi_reduction <add>, %40, %cst_10 [1, 2] : vector<1x2x1xf32> to vector<1xf32>
    %42 = vector.shape_cast %41 : vector<1xf32> to vector<1x1x1xf32>
    %43 = vector.extract %42[0, 0, 0] : f32 from vector<1x1x1xf32>
    %44 = vector.broadcast %43 : f32 to vector<1x1xf32>
    %45 = arith.addf %36, %44 : vector<1x1xf32>
    %46 = vector.broadcast %26 : vector<1x1xf32> to vector<2x1xf32>
    %47 = arith.subf %13, %46 : vector<2x1xf32>
    %48 = arith.mulf %47, %47 : vector<2x1xf32>
    %49 = vector.shape_cast %48 : vector<2x1xf32> to vector<1x2x1xf32>
    %cst_11 = arith.constant dense<0.000000e+00> : vector<1xf32>
    %50 = vector.multi_reduction <add>, %49, %cst_11 [1, 2] : vector<1x2x1xf32> to vector<1xf32>
    %51 = vector.shape_cast %50 : vector<1xf32> to vector<1x1x1xf32>
    %52 = vector.extract %51[0, 0, 0] : f32 from vector<1x1x1xf32>
    %53 = vector.broadcast %52 : f32 to vector<1x1xf32>
    %54 = arith.addf %45, %53 : vector<1x1xf32>
    %55 = vector.broadcast %26 : vector<1x1xf32> to vector<2x1xf32>
    %56 = arith.subf %16, %55 : vector<2x1xf32>
    %57 = arith.mulf %56, %56 : vector<2x1xf32>
    %58 = vector.shape_cast %57 : vector<2x1xf32> to vector<1x2x1xf32>
    %cst_12 = arith.constant dense<0.000000e+00> : vector<1xf32>
    %59 = vector.multi_reduction <add>, %58, %cst_12 [1, 2] : vector<1x2x1xf32> to vector<1xf32>
    %60 = vector.shape_cast %59 : vector<1xf32> to vector<1x1x1xf32>
    %61 = vector.extract %60[0, 0, 0] : f32 from vector<1x1x1xf32>
    %62 = vector.broadcast %61 : f32 to vector<1x1xf32>
    %63 = arith.addf %54, %62 : vector<1x1xf32>
    %c0_i32 = arith.constant 0 : i32
    %64 = arith.cmpi eq, %arg1, %c0_i32 : i32
    %65 = arith.extui %64 : i1 to i32
    %c0_i32_13 = arith.constant 0 : i32
    %66 = arith.cmpi ne, %65, %c0_i32_13 : i32
    scf.if %66 {
      %c0_17 = arith.constant 0 : index
      %c0_18 = arith.constant 0 : index
      %c0_19 = arith.constant 0 : index
      %70 = vector.load %arg4[%c0_17, %c0_18, %c0_19] : memref<1x1x1xf32, #tpu.memory_space<vmem>>, vector<1x1x1xf32>
      %71 = vector.shape_cast %70 : vector<1x1x1xf32> to vector<1x1xf32>
      %72 = vector.shape_cast %24 : vector<1x1xf32> to vector<1x1x1xf32>
      tpu.vector_store %arg4[%c0_17, %c0_18, %c0_19], %72 {strides = array<i32>} : memref<1x1x1xf32, #tpu.memory_space<vmem>>, vector<1x1x1xf32>,
      %c0_20 = arith.constant 0 : index
      %c0_21 = arith.constant 0 : index
      %c0_22 = arith.constant 0 : index
      %73 = vector.load %arg5[%c0_20, %c0_21, %c0_22] : memref<1x1x1xf32, #tpu.memory_space<vmem>>, vector<1x1x1xf32>
      %74 = vector.shape_cast %73 : vector<1x1x1xf32> to vector<1x1xf32>
      %75 = vector.shape_cast %63 : vector<1x1xf32> to vector<1x1x1xf32>
      tpu.vector_store %arg5[%c0_20, %c0_21, %c0_22], %75 {strides = array<i32>} : memref<1x1x1xf32, #tpu.memory_space<vmem>>, vector<1x1x1xf32>,
    } else {
    }
    %c0_i32_14 = arith.constant 0 : i32
    %67 = arith.cmpi sgt, %arg1, %c0_i32_14 : i32
    %68 = arith.extui %67 : i1 to i32
    %cst_15 = arith.constant 8.000000e+00 : f32
    %c0_i32_16 = arith.constant 0 : i32
    %69 = arith.cmpi ne, %68, %c0_i32_16 : i32
    scf.if %69 {
      %c0_17 = arith.constant 0 : index
      %c0_18 = arith.constant 0 : index
      %c0_19 = arith.constant 0 : index
      %70 = vector.load %arg4[%c0_17, %c0_18, %c0_19] : memref<1x1x1xf32, #tpu.memory_space<vmem>>, vector<1x1x1xf32>
      %71 = vector.shape_cast %70 : vector<1x1x1xf32> to vector<1x1xf32>
      %c0_20 = arith.constant 0 : index
      %c0_21 = arith.constant 0 : index
      %c0_22 = arith.constant 0 : index
      %72 = vector.load %arg5[%c0_20, %c0_21, %c0_22] : memref<1x1x1xf32, #tpu.memory_space<vmem>>, vector<1x1x1xf32>
      %73 = vector.shape_cast %72 : vector<1x1x1xf32> to vector<1x1xf32>
      %74 = arith.addf %4, %cst_15 : f32
      %cst_23 = arith.constant 1.000000e+00 : f32
      %75 = arith.divf %cst_23, %4 : f32
      %76 = vector.broadcast %75 : f32 to vector<1x1xf32>
      %77 = arith.mulf %71, %76 : vector<1x1xf32>
      %78 = arith.subf %26, %77 : vector<1x1xf32>
      %79 = arith.addf %71, %24 : vector<1x1xf32>
      %c0_24 = arith.constant 0 : index
      %c0_25 = arith.constant 0 : index
      %c0_26 = arith.constant 0 : index
      %80 = vector.load %arg4[%c0_24, %c0_25, %c0_26] : memref<1x1x1xf32, #tpu.memory_space<vmem>>, vector<1x1x1xf32>
      %81 = vector.shape_cast %80 : vector<1x1x1xf32> to vector<1x1xf32>
      %82 = vector.shape_cast %79 : vector<1x1xf32> to vector<1x1x1xf32>
      tpu.vector_store %arg4[%c0_24, %c0_25, %c0_26], %82 {strides = array<i32>} : memref<1x1x1xf32, #tpu.memory_space<vmem>>, vector<1x1x1xf32>,
      %83 = arith.addf %73, %63 : vector<1x1xf32>
      %84 = arith.mulf %78, %78 : vector<1x1xf32>
      %85 = arith.mulf %4, %cst_15 : f32
      %86 = arith.divf %85, %74 : f32
      %87 = vector.broadcast %86 : f32 to vector<1x1xf32>
      %88 = arith.mulf %84, %87 : vector<1x1xf32>
      %89 = arith.addf %83, %88 : vector<1x1xf32>
      %c0_27 = arith.constant 0 : index
      %c0_28 = arith.constant 0 : index
      %c0_29 = arith.constant 0 : index
      %90 = vector.load %arg5[%c0_27, %c0_28, %c0_29] : memref<1x1x1xf32, #tpu.memory_space<vmem>>, vector<1x1x1xf32>
      %91 = vector.shape_cast %90 : vector<1x1x1xf32> to vector<1x1xf32>
      %92 = vector.shape_cast %89 : vector<1x1xf32> to vector<1x1x1xf32>
      tpu.vector_store %arg5[%c0_27, %c0_28, %c0_29], %92 {strides = array<i32>} : memref<1x1x1xf32, #tpu.memory_space<vmem>>, vector<1x1x1xf32>,
    } else {
    }
    return
  }
  func.func @transform_0(%arg0: i32, %arg1: i32) -> (i32, i32) {
    %c1_i32 = arith.constant 1 : i32
    %0 = arith.muli %arg0, %c1_i32 : i32
    %1 = arith.addi %0, %arg1 : i32
    %c0_i32 = arith.constant 0 : i32
    %2 = arith.minsi %1, %c0_i32 : i32
    %c0_i32_0 = arith.constant 0 : i32
    %c0_i32_1 = arith.constant 0 : i32
    return %2, %c0_i32_0 : i32, i32
  }
  func.func @transform_1(%arg0: i32, %arg1: i32) -> (i32, i32) {
    %c1_i32 = arith.constant 1 : i32
    %0 = arith.muli %arg0, %c1_i32 : i32
    %1 = arith.addi %0, %arg1 : i32
    %c0_i32 = arith.constant 0 : i32
    %2 = arith.minsi %1, %c0_i32 : i32
    %c0_i32_0 = arith.constant 0 : i32
    %c0_i32_1 = arith.constant 0 : i32
    return %2, %c0_i32_0 : i32, i32
  }
  func.func @transform_2(%arg0: i32, %arg1: i32) -> (i32, i32, i32) {
    %c0_i32 = arith.constant 0 : i32
    %c0_i32_0 = arith.constant 0 : i32
    %c0_i32_1 = arith.constant 0 : i32
    return %arg0, %c0_i32, %c0_i32_0 : i32, i32, i32
  }
  func.func @transform_3(%arg0: i32, %arg1: i32) -> (i32, i32, i32) {
    %c0_i32 = arith.constant 0 : i32
    %c0_i32_0 = arith.constant 0 : i32
    %c0_i32_1 = arith.constant 0 : i32
    return %arg0, %c0_i32, %c0_i32_0 : i32, i32, i32
  }
}

</mosaic_0001>

<llo_original>
// kernel: tpu_custom_call.1
$region0: #{tpu_custom_call.1}
  #allocation0 [shape = 'u32[]', space=smem, size = 0x4, offset = 0x4, fixed_abs, tag = 'smem constant byte address 0x4 - core index']
  #allocation1 [shape = 'u32[72,128]{1,0:T(1,128)}', space=vmem, size = 0x9000, scoped, tag = 'internal scratch']
  %s0 = inlined_call_operand.hbm [shape: f32[2,128], index: 0, kind: input, shape index: {}]
  %s1 = inlined_call_operand.hbm [shape: f32[2,128], index: 1, kind: input, shape index: {}]
  %s2 = inlined_call_operand.hbm [shape: f32[1,1,1], index: 2, kind: output, shape index: {0}]
  %s3 = inlined_call_operand.hbm [shape: f32[1,1,1], index: 3, kind: output, shape index: {1}]
  %4 = xla_tuple %s2, %s3
  %s5 = sld [smem:[#allocation0]]
  $region42: #{tpu_custom_call.1} parent=0
    _
  %s7 = ssub.s32 1, %s5
  %s8 = scalar_select 0, %s7, %s5
  $region1: #{tpu_custom_call.1} parent=0
    #allocation2 [shape = 'u8[1024]{0}', space=vmem, size = 0x400, scoped, tag = 'input window, operand 0, single buffered']
    #allocation3 [shape = 's32[1]{0}', space=sflag, size = 0x4, scoped, tag = 'scoped memory for tpu_custom_call.1']
    #allocation4 [shape = 's32[1]{0}', space=sflag, size = 0x4, scoped, tag = 'scoped memory for tpu_custom_call.1']
    #allocation5 [shape = 'u8[1024]{0}', space=vmem, size = 0x400, scoped, tag = 'input window, operand 1, single buffered']
    #allocation6 [shape = 's32[1]{0}', space=sflag, size = 0x4, scoped, tag = 'scoped memory for tpu_custom_call.1']
    #allocation7 [shape = 'u8[512]{0}', space=vmem, size = 0x400, scoped, tag = 'output window, operand 0, single buffered']
    #allocation8 [shape = 'u8[512]{0}', space=vmem, size = 0x400, scoped, tag = 'output window, operand 1, single buffered']
    #allocation9 [shape = 's32[1]{0}', space=sflag, size = 0x4, scoped, tag = 'scoped memory for tpu_custom_call.1']
    %9 = vsyncpa [#allocation3], 0
    %10 = vsyncpa [#allocation6], 0
    %11 = vsyncpa [#allocation4], 0
    %12 = vsyncpa [#allocation9], 0
    // Predicated region
    $region2: #{tpu_custom_call.1} parent=1 // pred_check
      _
    $region3: #{tpu_custom_call.1} parent=1 // pred_check_branch
      %14 = sbr.rel (0) target = $region5
    $region4: #{tpu_custom_call.1} parent=1 // pred_region
      %s15 = sadd.s32 0, 0
      %p16 = scmp.lt.s32.totalorder %s15, 0
      %s17 = scalar_select %p16, %s15, 0
      %19 = vsyncadd [#allocation3], 0
      %s20 = smul.addr %s17, 2
      %s21 = scalar_lea.hbm %s0, %s20
      %s23 = sshll.u32 %s21, 4
      %s24 = int_to_ptr.hbm [resolvable:$true] %s23
      %s25 = sshll.u32 [#allocation2], 4
      %s26 = int_to_ptr.vmem [resolvable:$true] %s25
      %28 = dma.hbm_to_vmem [thread:$0]  %s24, 32, %s26, [#allocation3]
    $region5: #{tpu_custom_call.1} parent=1 // pred_fallthru
      _
    // Predicated region
    $region6: #{tpu_custom_call.1} parent=1 // pred_check
      _
    $region7: #{tpu_custom_call.1} parent=1 // pred_check_branch
      %30 = sbr.rel (0) target = $region9
    $region8: #{tpu_custom_call.1} parent=1 // pred_region
      %s31 = sadd.s32 0, 0
      %p32 = scmp.lt.s32.totalorder %s31, 0
      %s33 = scalar_select %p32, %s31, 0
      %35 = vsyncadd [#allocation6], 0
      %s36 = smul.addr %s33, 2
      %s37 = scalar_lea.hbm %s1, %s36
      %s39 = sshll.u32 %s37, 4
      %s40 = int_to_ptr.hbm [resolvable:$true] %s39
      %s41 = sshll.u32 [#allocation5], 4
      %s42 = int_to_ptr.vmem [resolvable:$true] %s41
      %44 = dma.hbm_to_vmem [thread:$0]  %s40, 32, %s42, [#allocation6]
    $region9: #{tpu_custom_call.1} parent=1 // pred_fallthru
      _
    // Predicated region
    $region10: #{tpu_custom_call.1} parent=1 // pred_check
      _
    $region11: #{tpu_custom_call.1} parent=1 // pred_check_branch
      %46 = sbr.rel (0) target = $region13
    $region12: #{tpu_custom_call.1} parent=1 // pred_region
      %48 = dma.done [#allocation3], 32
    $region13: #{tpu_custom_call.1} parent=1 // pred_fallthru
      _
    // Predicated region
    $region14: #{tpu_custom_call.1} parent=1 // pred_check
      _
    $region15: #{tpu_custom_call.1} parent=1 // pred_check_branch
      %50 = sbr.rel (0) target = $region17
    $region16: #{tpu_custom_call.1} parent=1 // pred_region
      %52 = dma.done [#allocation6], 32
    $region17: #{tpu_custom_call.1} parent=1 // pred_fallthru
      _
    %s53 = sadd.s32 0, 0
    %p54 = scmp.lt.s32.totalorder %s53, 0
    %s55 = scalar_select %p54, %s53, 0
    %s56 = sadd.s32 0, 0
    %p57 = scmp.lt.s32.totalorder %s56, 0
    %s58 = scalar_select %p57, %s56, 0
    %v59 = vld [vmem:[#allocation2] sm:$0x3]
    %v60 = vld [vmem:[#allocation5] sm:$0x3]
    %v61 = vmul.f32 %v59, %v60
    %s62 = smul.u32 0, 8
    %s63 = scvt.s32.f32 %s62
    %vm64 = vcmask 254976
    %v65 = vsel %vm64, %v61, 0.0
    %66 = vadd.xlane.f32.xlu0 %v65
    %v67 = vpop.xlane.xlu0 %66
    %69 = vrot.lane.b32.xlu0 %v61, 96
    %v70 = vpop.permute.xlu0 %69
    %v72 = vsel %vm64, %v70, 0.0
    %73 = vadd.xlane.f32.xlu0 %v72
    %v74 = vpop.xlane.xlu0 %73
    %75 = vrot.lane.b32.xlu0 %v61, 64
    %v76 = vpop.permute.xlu0 %75
    %v78 = vsel %vm64, %v76, 0.0
    %79 = vadd.xlane.f32.xlu0 %v78
    %v80 = vpop.xlane.xlu0 %79
    %81 = vrot.lane.b32.xlu0 %v61, 32
    %v82 = vpop.permute.xlu0 %81
    %v84 = vsel %vm64, %v82, 0.0
    %85 = vadd.xlane.f32.xlu0 %v84
    %v86 = vpop.xlane.xlu0 %85
    %v87 = vadd.f32 %v67, %v74
    %v88 = vadd.f32 %v87, %v80
    %v89 = vadd.f32 %v88, %v86
    %vm90 = vcmask 1024
    %v91 = vsel %vm90, %v89, 0.0
    %92 = vadd.xlane.f32.xlu0 %v91
    %v93 = vpop.xlane.xlu0 %92
    %v94 = vrot.slane %v93, 4
    %v95 = vadd.f32 %v93, %v94
    %v96 = vrot.slane %v95, 2
    %v97 = vadd.f32 %v95, %v96
    %v98 = vrot.slane %v97, 1
    %v99 = vadd.f32 %v97, %v98
    %s100 = vtos %v99
    %v101 = vstv %s100
    %v102 = vmul.f32 %v101, 0.125
    %v103 = vsub.f32 %v67, %v102
    %v104 = vmul.f32 %v103, %v103
    %v105 = vsel %vm90, %v104, 0.0
    %106 = vadd.xlane.f32.xlu0 %v105
    %v107 = vpop.xlane.xlu0 %106
    %v108 = vrot.slane %v107, 4
    %v109 = vadd.f32 %v107, %v108
    %v110 = vrot.slane %v109, 2
    %v111 = vadd.f32 %v109, %v110
    %v112 = vrot.slane %v111, 1
    %v113 = vadd.f32 %v111, %v112
    %s114 = vtos %v113
    %v115 = vstv %s114
    %v116 = vadd.f32 %v115, 0.0
    %v117 = vsub.f32 %v74, %v102
    %v118 = vmul.f32 %v117, %v117
    %v119 = vsel %vm90, %v118, 0.0
    %120 = vadd.xlane.f32.xlu0 %v119
    %v121 = vpop.xlane.xlu0 %120
    %v122 = vrot.slane %v121, 4
    %v123 = vadd.f32 %v121, %v122
    %v124 = vrot.slane %v123, 2
    %v125 = vadd.f32 %v123, %v124
    %v126 = vrot.slane %v125, 1
    %v127 = vadd.f32 %v125, %v126
    %s128 = vtos %v127
    %v129 = vstv %s128
    %v130 = vadd.f32 %v116, %v129
    %v131 = vsub.f32 %v80, %v102
    %v132 = vmul.f32 %v131, %v131
    %v133 = vsel %vm90, %v132, 0.0
    %134 = vadd.xlane.f32.xlu0 %v133
    %v135 = vpop.xlane.xlu0 %134
    %v136 = vrot.slane %v135, 4
    %v137 = vadd.f32 %v135, %v136
    %v138 = vrot.slane %v137, 2
    %v139 = vadd.f32 %v137, %v138
    %v140 = vrot.slane %v139, 1
    %v141 = vadd.f32 %v139, %v140
    %s142 = vtos %v141
    %v143 = vstv %s142
    %v144 = vadd.f32 %v130, %v143
    %v145 = vsub.f32 %v86, %v102
    %v146 = vmul.f32 %v145, %v145
    %v147 = vsel %vm90, %v146, 0.0
    %148 = vadd.xlane.f32.xlu0 %v147
    %v149 = vpop.xlane.xlu0 %148
    %v150 = vrot.slane %v149, 4
    %v151 = vadd.f32 %v149, %v150
    %v152 = vrot.slane %v151, 2
    %v153 = vadd.f32 %v151, %v152
    %v154 = vrot.slane %v153, 1
    %v155 = vadd.f32 %v153, %v154
    %s156 = vtos %v155
    %v157 = vstv %s156
    %v158 = vadd.f32 %v144, %v157
    %p159 = scmp.eq.s32.totalorder 0, 0
    // Predicated region
    $region18: #{tpu_custom_call.1} parent=1 // pred_check
      %p160 = pneg %p159
    $region19: #{tpu_custom_call.1} parent=1 // pred_check_branch
      %162 = sbr.rel (%p160) target = $region21
    $region20: #{tpu_custom_call.1} parent=1 // pred_region
      %vm163 = vcmask 0
      %164 = vst.msk [vmem:[#allocation7] sm:$0x1] %vm163, %v101
      %165 = vst.msk [vmem:[#allocation8] sm:$0x1] %vm163, %v158
    $region21: #{tpu_custom_call.1} parent=1 // pred_fallthru
      _
    %p166 = scmp.gt.s32.totalorder 0, 0
    // Predicated region
    $region22: #{tpu_custom_call.1} parent=1 // pred_check
      %p167 = pneg %p166
    $region23: #{tpu_custom_call.1} parent=1 // pred_check_branch
      %169 = sbr.rel (%p167) target = $region25
    $region24: #{tpu_custom_call.1} parent=1 // pred_region
      %v170 = vld [vmem:[#allocation7] sm:$0x1]
      %v171 = vld [vmem:[#allocation8] sm:$0x1]
      %s172 = sadd.f32 %s63, 8.0
      %v173 = vstv %s63
      %v174 = vrcp.pop %v173
      %v175 = vmul.f32 %v173, %v174
      %v176 = vsub.f32 1.0, %v175
      %v177 = vmul.f32 %v174, %v176
      %v178 = vadd.f32 %v174, %v177
      %vm179 = vweird.f32 %v173
      %vm180 = vweird.f32 %v174
      %vm181 = vmor %vm179, %vm180
      %v182 = vsel %vm181, %v174, %v178
      %v183 = vand.u32 2147483647, %v173
      %vm184 = vcmp.eq.f32.partialorder %v183, 8.507059e+37
      %v185 = vand.u32 %v173, 2147483648
      %v186 = vor.u32 1.1754944e-38, %v185
      %v187 = vsel %vm184, %v186, %v182
      %s188 = vtos %v187
      %v189 = vstv %s188
      %v190 = vmul.f32 %v170, %v189
      %v191 = vsub.f32 %v102, %v190
      %v192 = vadd.f32 %v170, %v101
      %vm193 = vcmask 0
      %194 = vst.msk [vmem:[#allocation7] sm:$0x1] %vm193, %v192
      %v195 = vadd.f32 %v171, %v158
      %v196 = vmul.f32 %v191, %v191
      %s197 = smul.f32 %s63, 8.0
      %v198 = vstv %s172
      %v199 = vrcp.pop %v198
      %v200 = vmul.f32 %v198, %v199
      %v201 = vsub.f32 1.0, %v200
      %v202 = vmul.f32 %v199, %v201
      %v203 = vadd.f32 %v199, %v202
      %vm204 = vweird.f32 %v198
      %vm205 = vweird.f32 %v199
      %vm206 = vmor %vm204, %vm205
      %v207 = vsel %vm206, %v199, %v203
      %v208 = vand.u32 2147483647, %v198
      %vm209 = vcmp.eq.f32.partialorder %v208, 8.507059e+37
      %v210 = vand.u32 %v198, 2147483648
      %v211 = vor.u32 1.1754944e-38, %v210
      %v212 = vsel %vm209, %v211, %v207
      %s213 = vtos %v212
      %s214 = smul.f32 %s197, %s213
      %v215 = vstv %s214
      %v216 = vmul.f32 %v196, %v215
      %v217 = vadd.f32 %v195, %v216
      %218 = vst.msk [vmem:[#allocation8] sm:$0x1] %vm193, %v217
    $region25: #{tpu_custom_call.1} parent=1 // pred_fallthru
      _
    // Predicated region
    $region26: #{tpu_custom_call.1} parent=1 // pred_check
      _
    $region27: #{tpu_custom_call.1} parent=1 // pred_check_branch
      %220 = sbr.rel (0) target = $region29
    $region28: #{tpu_custom_call.1} parent=1 // pred_region
      %222 = vsyncadd [#allocation4], 0
      %s224 = sshll.u32 [#allocation7], 4
      %s225 = int_to_ptr.vmem [resolvable:$true] %s224
      %s226 = sshll.u32 %s2, 4
      %s227 = int_to_ptr.hbm [resolvable:$true] %s226
      %229 = dma.vmem_to_hbm [thread:$0]  %s225, 16, %s227, [#allocation4]
    $region29: #{tpu_custom_call.1} parent=1 // pred_fallthru
      _
    // Predicated region
    $region30: #{tpu_custom_call.1} parent=1 // pred_check
      _
    $region31: #{tpu_custom_call.1} parent=1 // pred_check_branch
      %231 = sbr.rel (0) target = $region33
    $region32: #{tpu_custom_call.1} parent=1 // pred_region
      %233 = vsyncadd [#allocation9], 0
      %s235 = sshll.u32 [#allocation8], 4
      %s236 = int_to_ptr.vmem [resolvable:$true] %s235
      %s237 = sshll.u32 %s3, 4
      %s238 = int_to_ptr.hbm [resolvable:$true] %s237
      %240 = dma.vmem_to_hbm [thread:$0]  %s236, 16, %s238, [#allocation9]
    $region33: #{tpu_custom_call.1} parent=1 // pred_fallthru
      _
    // Predicated region
    $region34: #{tpu_custom_call.1} parent=1 // pred_check
      _
    $region35: #{tpu_custom_call.1} parent=1 // pred_check_branch
      %242 = sbr.rel (0) target = $region37
    $region36: #{tpu_custom_call.1} parent=1 // pred_region
      %244 = dma.done [#allocation4], 16
    $region37: #{tpu_custom_call.1} parent=1 // pred_fallthru
      _
    // Predicated region
    $region38: #{tpu_custom_call.1} parent=1 // pred_check
      _
    $region39: #{tpu_custom_call.1} parent=1 // pred_check_branch
      %246 = sbr.rel (0) target = $region41
    $region40: #{tpu_custom_call.1} parent=1 // pred_region
      %248 = dma.done [#allocation9], 16
    $region41: #{tpu_custom_call.1} parent=1 // pred_fallthru
      _
    %249 = vsyncpa [#allocation3], 1
    %250 = vsyncpa [#allocation6], 1
    %251 = vsyncpa [#allocation4], 1
    %252 = vsyncpa [#allocation9], 1

</llo_original>
